<compile_context>
chip_gen: v5e
topology: v5e:2x2
jax: 0.10.0
libtpu: 0.0.40
codegen_flags: <defaults>
</compile_context>

<pallas_src>
import jax
import jax.numpy as jnp
from jax.experimental import pallas as pl
from jax.experimental.pallas import tpu as pltpu


def _soda_pta_fused_kernel(state_ref,   # (1, TN)  lane-dense state tile
                           weff_ref,    # (H, 1)   folded first-layer weight
                           beff_ref,    # (H, 1)   folded first-layer bias
                           w2n_ref,     # (H, 1)   -base_model W2 (transposed)
                           b2n_ref,     # (1, 1)   -base_model b2 (SMEM scalar)
                           out_ref):    # (1, TN)
    s = state_ref[...]                                   # (1, TN)
    w = weff_ref[...]                                    # (H, 1)
    b = beff_ref[...]                                    # (H, 1)
    # hidden activations laid out (H, TN): VPU broadcast-FMA + EUP tanh, no MXU
    h = jnp.tanh(s * w + b)                              # (H, TN)
    # second layer: sublane (H) reduce of h * (-w2), then scalar bias from SMEM
    red = jnp.sum(h * w2n_ref[...], axis=0, keepdims=True)   # (1, TN)
    out_ref[...] = red + b2n_ref[0, 0]                   # full-width lane-dense store


def _round_up(x, m):
    return (x + m - 1) // m * m


def soda_pta_forward(t, state, params):
    """JAX wrapper for Soda_PTA_Optimizer.forward(t, state).

    `t` is accepted for signature parity with the ODE func but (as in the
    PyTorch module) does not enter the computation.
    """
    del t
    (wpta_t, bpta, cirfeat, w1a_t, w1b_t, b1, w2_t, b2) = params

    # ---- algebraic fold of the first layer (constant work, independent of N)
    w_eff = wpta_t @ w1a_t + cirfeat @ w1b_t           # (1, H)
    b_eff = bpta @ w1a_t + b1                          # (1, H)
    w_eff_col = w_eff.T.astype(jnp.float32)            # (H, 1)
    b_eff_col = b_eff.T.astype(jnp.float32)            # (H, 1)
    # fold the trailing negation into the second layer
    w2_neg = (-w2_t).astype(jnp.float32)               # (H, 1)
    b2_neg = (-b2).astype(jnp.float32)                 # (1, 1)
    hdim = w_eff_col.shape[0]

    # ---- lane-dense layout: N on the last axis, padded to a 128 multiple
    n = state.shape[0]
    lane = 128
    tn = min(512, _round_up(n, lane))                  # tile over N (lane axis)
    padded = _round_up(n, tn)
    state_row = jnp.zeros((1, padded), jnp.float32).at[0, :n].set(
        state.astype(jnp.float32))

    out = pl.pallas_call(
        _soda_pta_fused_kernel,
        out_shape=jax.ShapeDtypeStruct((1, padded), jnp.float32),
        grid=(padded // tn,),
        in_specs=[
            pl.BlockSpec((1, tn), lambda i: (0, i)),               # state tile
            pl.BlockSpec((hdim, 1), lambda i: (0, 0)),             # w_eff (resident)
            pl.BlockSpec((hdim, 1), lambda i: (0, 0)),             # b_eff (resident)
            pl.BlockSpec((hdim, 1), lambda i: (0, 0)),             # -w2  (resident)
            pl.BlockSpec(memory_space=pltpu.MemorySpace.SMEM),     # -b2 scalar
        ],
        out_specs=pl.BlockSpec((1, tn), lambda i: (0, i)),
        compiler_params=pltpu.CompilerParams(
            dimension_semantics=("parallel",)),                    # engage both TCs on v7x
    )(state_row, w_eff_col, b_eff_col, w2_neg, b2_neg)

    return out[0, :n]


def _reference_forward(state, params):
    """Pure-JAX reference replicating the PyTorch semantics exactly (unfused)."""
    (wpta_t, bpta, cirfeat, w1a_t, w1b_t, b1, w2_t, b2) = params
    s = state.reshape(-1, 1)
    tmp1 = s @ wpta_t + bpta                        # pta_model(state)
    tmp2 = s @ cirfeat                              # state.reshape(-1,1) @ cirfeat
    tmp = jnp.concatenate([tmp1, tmp2], axis=1)     # cat(dim=1)
    w1_t = jnp.concatenate([w1a_t, w1b_t], axis=0)  # (K+F, H)
    h = jnp.tanh(tmp @ w1_t + b1)                   # base_model hidden
    out = h @ w2_t + b2                             # base_model output
    return -out.reshape(-1)


if __name__ == "__main__":
    K, F, H = 4, 16, 32   # pta feats, GNN circuit feats, base-model hidden

    key = jax.random.PRNGKey(0)
    ks = jax.random.split(key, 10)

    wpta_t = jax.random.normal(ks[1], (1, K), dtype=jnp.float32) * 0.5  # pta linear.weight.T
    bpta = jax.random.normal(ks[2], (1, K), dtype=jnp.float32) * 0.1    # pta linear.bias
    cirfeat = jax.random.normal(ks[3], (1, F), dtype=jnp.float32)       # GNN output feature row
    w1a_t = jax.random.normal(ks[4], (K, H), dtype=jnp.float32) * 0.3   # base W1.T (tmp1 block)
    w1b_t = jax.random.normal(ks[5], (F, H), dtype=jnp.float32) * 0.3   # base W1.T (tmp2 block)
    b1 = jax.random.normal(ks[6], (1, H), dtype=jnp.float32) * 0.1
    w2_t = jax.random.normal(ks[7], (H, 1), dtype=jnp.float32) * 0.3    # base W2.T
    b2 = jax.random.normal(ks[8], (1, 1), dtype=jnp.float32) * 0.1
    params = (wpta_t, bpta, cirfeat, w1a_t, w1b_t, b1, w2_t, b2)

    t0 = jnp.float32(0.0)

    # small case (single padded tile)
    state_small = jax.random.normal(ks[0], (8,), dtype=jnp.float32)
    out_small = jax.block_until_ready(soda_pta_forward(t0, state_small, params))
    ref_small = _reference_forward(state_small, params)
    assert out_small.shape == (8,)
    assert jnp.allclose(out_small, ref_small, atol=1e-4, rtol=1e-4), (out_small, ref_small)

    # multi-tile case (exercises grid pipelining + padding slice-off)
    state_big = jax.random.normal(ks[9], (1000,), dtype=jnp.float32)
    out_big = jax.block_until_ready(soda_pta_forward(t0, state_big, params))
    ref_big = _reference_forward(state_big, params)
    assert out_big.shape == (1000,)
    assert jnp.allclose(out_big, ref_big, atol=1e-4, rtol=1e-4)

    print("KERNEL_OK")
</pallas_src>

<mosaic_0001>
module attributes {stable_mosaic.version = 11 : i64} {
  func.func @_soda_pta_fused_kernel(%arg0: i32, %arg1: memref<1x128xf32, #tpu.memory_space<vmem>>, %arg2: memref<32x1xf32, #tpu.memory_space<vmem>>, %arg3: memref<32x1xf32, #tpu.memory_space<vmem>>, %arg4: memref<32x1xf32, #tpu.memory_space<vmem>>, %arg5: memref<1x1xf32, #tpu.memory_space<smem>>, %arg6: memref<1x128xf32, #tpu.memory_space<vmem>>) attributes {dimension_semantics = [#tpu.dimension_semantics<parallel>], iteration_bounds = array<i64: 1>, scalar_prefetch = 0 : i64, scratch_operands = 0 : i64, tpu.core_type = #tpu.core_type<tc>, window_params = [{transform_indices = @transform_0, window_bounds = array<i64: 1, 128>}, {pipeline_mode = #tpu.pipeline_mode<synchronous>, transform_indices = @transform_1, window_bounds = array<i64: 32, 1>}, {pipeline_mode = #tpu.pipeline_mode<synchronous>, transform_indices = @transform_2, window_bounds = array<i64: 32, 1>}, {pipeline_mode = #tpu.pipeline_mode<synchronous>, transform_indices = @transform_3, window_bounds = array<i64: 32, 1>}, {transform_indices = @transform_4, window_bounds = array<i64: 1, 1>}, {transform_indices = @transform_5, window_bounds = array<i64: 1, 128>}]} {
    %c0 = arith.constant 0 : index
    %c0_0 = arith.constant 0 : index
    %0 = vector.load %arg1[%c0, %c0_0] : memref<1x128xf32, #tpu.memory_space<vmem>>, vector<1x128xf32>
    %c0_1 = arith.constant 0 : index
    %c0_2 = arith.constant 0 : index
    %1 = vector.load %arg2[%c0_1, %c0_2] : memref<32x1xf32, #tpu.memory_space<vmem>>, vector<32x1xf32>
    %c0_3 = arith.constant 0 : index
    %c0_4 = arith.constant 0 : index
    %2 = vector.load %arg3[%c0_3, %c0_4] : memref<32x1xf32, #tpu.memory_space<vmem>>, vector<32x1xf32>
    %3 = vector.broadcast %0 : vector<1x128xf32> to vector<32x128xf32>
    %4 = vector.broadcast %1 : vector<32x1xf32> to vector<32x128xf32>
    %5 = arith.mulf %3, %4 : vector<32x128xf32>
    %6 = vector.broadcast %2 : vector<32x1xf32> to vector<32x128xf32>
    %7 = arith.addf %5, %6 : vector<32x128xf32>
    %8 = math.tanh %7 : vector<32x128xf32>
    %c0_5 = arith.constant 0 : index
    %c0_6 = arith.constant 0 : index
    %9 = vector.load %arg4[%c0_5, %c0_6] : memref<32x1xf32, #tpu.memory_space<vmem>>, vector<32x1xf32>
    %10 = vector.broadcast %9 : vector<32x1xf32> to vector<32x128xf32>
    %11 = arith.mulf %8, %10 : vector<32x128xf32>
    %cst = arith.constant dense<0.000000e+00> : vector<128xf32>
    %12 = vector.multi_reduction <add>, %11, %cst [0] : vector<32x128xf32> to vector<128xf32>
    %13 = vector.shape_cast %12 : vector<128xf32> to vector<1x128xf32>
    %c0_7 = arith.constant 0 : index
    %c0_8 = arith.constant 0 : index
    %14 = memref.load %arg5[%c0_7, %c0_8] : memref<1x1xf32, #tpu.memory_space<smem>>
    %15 = vector.broadcast %14 : f32 to vector<1x128xf32>
    %16 = arith.addf %13, %15 : vector<1x128xf32>
    %c0_9 = arith.constant 0 : index
    %c0_10 = arith.constant 0 : index
    %17 = vector.load %arg6[%c0_9, %c0_10] : memref<1x128xf32, #tpu.memory_space<vmem>>, vector<1x128xf32>
    tpu.vector_store %arg6[%c0_9, %c0_10], %16 {strides = array<i32>} : memref<1x128xf32, #tpu.memory_space<vmem>>, vector<1x128xf32>,
    return
  }
  func.func @transform_0(%arg0: i32) -> (i32, i32) {
    %c0_i32 = arith.constant 0 : i32
    %c0_i32_0 = arith.constant 0 : i32
    return %c0_i32, %arg0 : i32, i32
  }
  func.func @transform_1(%arg0: i32) -> (i32, i32) {
    %c0_i32 = arith.constant 0 : i32
    %c0_i32_0 = arith.constant 0 : i32
    %c0_i32_1 = arith.constant 0 : i32
    return %c0_i32, %c0_i32_0 : i32, i32
  }
  func.func @transform_2(%arg0: i32) -> (i32, i32) {
    %c0_i32 = arith.constant 0 : i32
    %c0_i32_0 = arith.constant 0 : i32
    %c0_i32_1 = arith.constant 0 : i32
    return %c0_i32, %c0_i32_0 : i32, i32
  }
  func.func @transform_3(%arg0: i32) -> (i32, i32) {
    %c0_i32 = arith.constant 0 : i32
    %c0_i32_0 = arith.constant 0 : i32
    %c0_i32_1 = arith.constant 0 : i32
    return %c0_i32, %c0_i32_0 : i32, i32
  }
  func.func @transform_4(%arg0: i32) -> (i32, i32) {
    %c0_i32 = arith.constant 0 : i32
    %c0_i32_0 = arith.constant 0 : i32
    %c0_i32_1 = arith.constant 0 : i32
    return %c0_i32, %c0_i32_0 : i32, i32
  }
  func.func @transform_5(%arg0: i32) -> (i32, i32) {
    %c0_i32 = arith.constant 0 : i32
    %c0_i32_0 = arith.constant 0 : i32
    return %c0_i32, %arg0 : i32, i32
  }
}

</mosaic_0001>

<llo_original>
// kernel: tpu_custom_call.1
$region0: #{tpu_custom_call.1}
  #allocation0 [shape = 'u32[]', space=smem, size = 0x4, offset = 0x4, fixed_abs, tag = 'smem constant byte address 0x4 - core index']
  #allocation1 [shape = 'u32[72,128]{1,0:T(1,128)}', space=vmem, size = 0x9000, scoped, tag = 'internal scratch']
  #allocation2 [shape = 'f32[1,1]{1,0:T(1,128)S(6)}', space=smem, size = 0x200, scoped, tag = 'scoped memory for tpu_custom_call.1']
  %s0 = inlined_call_operand.vmem [shape: f32[1,128], index: 0, kind: input, shape index: {}]
  %s1 = inlined_call_operand.vmem [shape: f32[32,1], index: 1, kind: input, shape index: {}]
  %s2 = inlined_call_operand.vmem [shape: f32[32,1], index: 2, kind: input, shape index: {}]
  %s3 = inlined_call_operand.vmem [shape: f32[32,1], index: 3, kind: input, shape index: {}]
  %s4 = inlined_call_operand.<no memory space> [shape: f32[1,1], index: 4, kind: input, shape index: {}]
  %s5 = inlined_call_operand.hbm [shape: f32[1,128], index: 5, kind: output, shape index: {}]
  %s6 = sld [smem:[#allocation0]]
  $region30: #{tpu_custom_call.1} parent=0
    _
  %s8 = ssub.s32 1, %s6
  %s9 = scalar_select 0, %s8, %s6
  %10 = sst [smem:[#allocation2]] %s4
  $region1: #{tpu_custom_call.1} parent=0
    #allocation3 [shape = 'u8[512]{0}', space=vmem, size = 0x400, scoped, tag = 'output window, operand 0, single buffered']
    #allocation4 [shape = 's32[1]{0}', space=sflag, size = 0x4, scoped, tag = 'scoped memory for tpu_custom_call.1']
    %11 = vsyncpa [#allocation4], 0
    // Predicated region
    $region2: #{tpu_custom_call.1} parent=1 // pred_check
      _
    $region3: #{tpu_custom_call.1} parent=1 // pred_check_branch
      %13 = sbr.rel (0) target = $region5
    $region4: #{tpu_custom_call.1} parent=1 // pred_region
      _
    $region5: #{tpu_custom_call.1} parent=1 // pred_fallthru
      _
    // Predicated region
    $region6: #{tpu_custom_call.1} parent=1 // pred_check
      _
    $region7: #{tpu_custom_call.1} parent=1 // pred_check_branch
      %15 = sbr.rel (0) target = $region9
    $region8: #{tpu_custom_call.1} parent=1 // pred_region
      _
    $region9: #{tpu_custom_call.1} parent=1 // pred_fallthru
      _
    // Predicated region
    $region10: #{tpu_custom_call.1} parent=1 // pred_check
      _
    $region11: #{tpu_custom_call.1} parent=1 // pred_check_branch
      %17 = sbr.rel (0) target = $region13
    $region12: #{tpu_custom_call.1} parent=1 // pred_region
      _
    $region13: #{tpu_custom_call.1} parent=1 // pred_fallthru
      _
    // Predicated region
    $region14: #{tpu_custom_call.1} parent=1 // pred_check
      _
    $region15: #{tpu_custom_call.1} parent=1 // pred_check_branch
      %19 = sbr.rel (0) target = $region17
    $region16: #{tpu_custom_call.1} parent=1 // pred_region
      _
    $region17: #{tpu_custom_call.1} parent=1 // pred_fallthru
      _
    // Predicated region
    $region18: #{tpu_custom_call.1} parent=1 // pred_check
      _
    $region19: #{tpu_custom_call.1} parent=1 // pred_check_branch
      %21 = sbr.rel (0) target = $region21
    $region20: #{tpu_custom_call.1} parent=1 // pred_region
      _
    $region21: #{tpu_custom_call.1} parent=1 // pred_fallthru
      _
    %v22 = vld [vmem:[%s0] sm:$0x1]
    %v23 = vld [vmem:[%s1] sm:$0xff]
    %v24 = vld [vmem:[%s1 + $0x8] sm:$0xff]
    %v25 = vld [vmem:[%s1 + $0x10] sm:$0xff]
    %v26 = vld [vmem:[%s1 + $0x18] sm:$0xff]
    %v27 = vld [vmem:[%s2] sm:$0xff]
    %v28 = vld [vmem:[%s2 + $0x8] sm:$0xff]
    %v29 = vld [vmem:[%s2 + $0x10] sm:$0xff]
    %v30 = vld [vmem:[%s2 + $0x18] sm:$0xff]
    %v32 = vperm.slane %v22, 0
    %35 = vset.pattern.permute.xlu0 0
    %36 = vperm.xlu0 %35, %v23
    %v37 = vpop.permute.xlu0 %36
    %40 = vset.pattern.permute.xlu0 0
    %41 = vperm.xlu0 %40, %v24
    %v42 = vpop.permute.xlu0 %41
    %45 = vset.pattern.permute.xlu0 0
    %46 = vperm.xlu0 %45, %v25
    %v47 = vpop.permute.xlu0 %46
    %50 = vset.pattern.permute.xlu0 0
    %51 = vperm.xlu0 %50, %v26
    %v52 = vpop.permute.xlu0 %51
    %v54 = vmul.f32 %v32, %v37
    %v55 = vmul.f32 %v32, %v42
    %v56 = vmul.f32 %v32, %v47
    %v57 = vmul.f32 %v32, %v52
    %59 = vset.pattern.permute.xlu0 0
    %60 = vperm.xlu0 %59, %v27
    %v61 = vpop.permute.xlu0 %60
    %64 = vset.pattern.permute.xlu0 0
    %65 = vperm.xlu0 %64, %v28
    %v66 = vpop.permute.xlu0 %65
    %69 = vset.pattern.permute.xlu0 0
    %70 = vperm.xlu0 %69, %v29
    %v71 = vpop.permute.xlu0 %70
    %74 = vset.pattern.permute.xlu0 0
    %75 = vperm.xlu0 %74, %v30
    %v76 = vpop.permute.xlu0 %75
    %v78 = vadd.f32 %v54, %v61
    %v79 = vadd.f32 %v55, %v66
    %v80 = vadd.f32 %v56, %v71
    %v81 = vadd.f32 %v57, %v76
    %v82 = vtanh.pop %v78
    %v83 = vtanh.pop %v79
    %v84 = vtanh.pop %v80
    %v85 = vtanh.pop %v81
    %v86 = vld [vmem:[%s3] sm:$0xff]
    %v87 = vld [vmem:[%s3 + $0x8] sm:$0xff]
    %v88 = vld [vmem:[%s3 + $0x10] sm:$0xff]
    %v89 = vld [vmem:[%s3 + $0x18] sm:$0xff]
    %91 = vset.pattern.permute.xlu0 0
    %92 = vperm.xlu0 %91, %v86
    %v93 = vpop.permute.xlu0 %92
    %96 = vset.pattern.permute.xlu0 0
    %97 = vperm.xlu0 %96, %v87
    %v98 = vpop.permute.xlu0 %97
    %101 = vset.pattern.permute.xlu0 0
    %102 = vperm.xlu0 %101, %v88
    %v103 = vpop.permute.xlu0 %102
    %106 = vset.pattern.permute.xlu0 0
    %107 = vperm.xlu0 %106, %v89
    %v108 = vpop.permute.xlu0 %107
    %v110 = vmul.f32 %v82, %v93
    %v111 = vmul.f32 %v83, %v98
    %v112 = vmul.f32 %v84, %v103
    %v113 = vmul.f32 %v85, %v108
    %v114 = vadd.f32 %v110, %v111
    %v115 = vadd.f32 %v114, %v112
    %v116 = vadd.f32 %v115, %v113
    %v117 = vrot.slane %v116, 4
    %v118 = vadd.f32 %v116, %v117
    %v119 = vrot.slane %v118, 2
    %v120 = vadd.f32 %v118, %v119
    %v121 = vrot.slane %v120, 1
    %v122 = vadd.f32 %v120, %v121
    %s123 = sld [smem:[#allocation2]]
    %v124 = vstv %s123
    %v125 = vadd.f32 %v122, %v124
    %126 = vst [vmem:[#allocation3] sm:$0x1] %v125
    // Predicated region
    $region22: #{tpu_custom_call.1} parent=1 // pred_check
      _
    $region23: #{tpu_custom_call.1} parent=1 // pred_check_branch
      %128 = sbr.rel (0) target = $region25
    $region24: #{tpu_custom_call.1} parent=1 // pred_region
      %130 = vsyncadd [#allocation4], 0
      %s132 = sshll.u32 [#allocation3], 4
      %s133 = int_to_ptr.vmem [resolvable:$true] %s132
      %s134 = sshll.u32 %s5, 4
      %s135 = int_to_ptr.hbm [resolvable:$true] %s134
      %137 = dma.vmem_to_hbm [thread:$0]  %s133, 16, %s135, [#allocation4]
    $region25: #{tpu_custom_call.1} parent=1 // pred_fallthru
      _
    // Predicated region
    $region26: #{tpu_custom_call.1} parent=1 // pred_check
      _
    $region27: #{tpu_custom_call.1} parent=1 // pred_check_branch
      %139 = sbr.rel (0) target = $region29
    $region28: #{tpu_custom_call.1} parent=1 // pred_region
      %141 = dma.done [#allocation4], 16
    $region29: #{tpu_custom_call.1} parent=1 // pred_fallthru
      _
    %142 = vsyncpa [#allocation4], 1

</llo_original>
